<compile_context>
chip_gen: v5e
topology: v5e:2x2
jax: 0.10.0
libtpu: 0.0.40
codegen_flags: <defaults>
</compile_context>

<pallas_src>
import functools

import numpy as np

import jax
import jax.numpy as jnp
from jax.experimental import pallas as pl
from jax.experimental.pallas import tpu as pltpu

SLOPE = 0.01                           # nn.LeakyReLU default negative_slope
_LN10_OVER_10 = float(np.log(10.0) / 10.0)

# pltpu.roll is documented to match jnp.roll; the sign is verified once
# on-device in __main__ (see _detect_roll_sign) so the tap shifts cannot flip.
_ROLL_SIGN = 1

# ---- packed-parameter index constants ---------------------------------------
# offsets into the (n*9, Cout, Cin) conv-weight stacks (9 taps per conv)
WFF_E2, WFF_RB1, WFF_RB2, WFF_UPC = 0, 9, 18, 27     # (cf, cf) convs
WL8_E1, WL8_D1 = 0, 9                                # (cf, 8)  convs
WUP_SUBPEL, WUP_SKIP = 0, 9                          # (4cf, cf) convs
# (4*c_feat, 1) bias columns, stacked as (2, 4cf, 1)
UPB_SUBPEL, UPB_SKIP = 0, 1
# (c_feat, 1) column vectors, stacked as (13, cf, 1)
(CV_B_E1, CV_B_E2, CV_B_D1, CV_B_RB1, CV_B_RB2, CV_B_UPC,
 CV_AFE_W1S, CV_AFE_B1, CV_AFE_B2,
 CV_AFD_W1S, CV_AFD_B1, CV_AFD_B2,
 CV_IGDN_BETA) = range(13)
# (c_feat, c_feat) square matrices, stacked as (5, cf, cf)
SQ_AFE_W1X, SQ_AFE_W2, SQ_AFD_W1X, SQ_AFD_W2, SQ_IGDN_GAMMA = range(5)


def _leaky(x):
    return jnp.where(x >= 0, x, SLOPE * x)


def _roll_lanes(x, shift, in_kernel):
    """Circular lane shift: out[:, p] = x[:, (p - shift) % P]."""
    p = x.shape[1]
    s = shift % p
    if s == 0:
        return x
    if in_kernel:
        return pltpu.roll(x, shift=(_ROLL_SIGN * shift) % p, axis=1)
    return jnp.roll(x, s, axis=1)


# ----------------------------------------------------------------------------
# Shared math: runs both inside the Pallas kernel (bundle leaves are Refs,
# indexed lazily at point of use) and as the plain-jnp reference (leaves are
# arrays; identical indexing works).  Activations are (channels, B*H*W).
# ----------------------------------------------------------------------------
def _conv3x3(x, w, wbase, b, masks, width, in_kernel, act=False):
    """3x3 conv (padding=1) on (Cin, P) -> (Cout, P).

    w:     weight stack (ref or array) of shape (n*9, Cout, Cin); this conv's
           9 taps live at rows [wbase, wbase+9), tap order k = (dh+1)*3+(dw+1).
    b:     (Cout, 1) bias.
    masks: (9, P) 0/1 border masks — together with the circular roll they
           realise the zero padding (every wrapped / cross-row lane is masked),
           so there is no jnp.pad and no concat-with-zeros copy.
    No im2col slab: 9 small accumulated matmuls instead (saves the (9*Cin, P)
    store + reload per conv; the MXU is idle at these sizes either way).
    """
    acc = None
    k = 0
    for dh in (-1, 0, 1):
        for dw in (-1, 0, 1):
            d = dh * width + dw
            tap = _roll_lanes(x, -d, in_kernel)      # out[:, p] = x[:, p + d]
            if d != 0:                               # centre mask is all ones
                tap = tap * masks[k:k + 1, :]
            part = jnp.dot(w[wbase + k], tap, preferred_element_type=jnp.float32)
            acc = part if acc is None else acc + part
            k += 1
    out = acc + b
    return _leaky(out) if act else out


def _af(w1x, w1s, b1, w2, b2, x, snr, avg_mat, img_masks):
    """AFModule: channel gate from per-image spatial mean + SNR context.

    The (C+1, B) concat and the K=2 broadcast matmul are gone: the SNR column
    is folded in as `w1s * snr`, and the (C, B) gate is broadcast back to
    (C, P) with the per-image 0/1 lane masks.
    """
    ctx = jnp.dot(x, avg_mat, preferred_element_type=jnp.float32)       # (C, B)
    h = _leaky(jnp.dot(w1x, ctx, preferred_element_type=jnp.float32)
               + w1s * snr + b1)
    a = jax.nn.sigmoid(jnp.dot(w2, h, preferred_element_type=jnp.float32) + b2)
    gate = None
    for bb in range(img_masks.shape[0]):
        g = a[:, bb:bb + 1] * img_masks[bb:bb + 1, :]
        gate = g if gate is None else gate + g
    return x * gate


def _igdn(x, gamma, beta):
    """Inverse GDN: y = x * sqrt(beta + gamma @ x^2)."""
    # TODO(synk): apply CompressAI's NonNegativeParametrizer when importing
    #             trained gamma/beta; the deterministic positive init is safe.
    return x * jnp.sqrt(jnp.dot(gamma, x * x,
                                preferred_element_type=jnp.float32) + beta)


def _pixel_shuffle(x, up0, width_hi, in_kernel):
    """PixelShuffle r=2 on (4*C, P_lo) -> (C, P_hi = 4*P_lo).

    Channel rows are grouped [subpixel g = 2*i + j][c] (reorder torch subpel
    conv channels (c, i, j) -> (g, c) when importing real weights).  `up0`
    scatters a low-res pixel to its (even row, even col) high-res lane; the
    other three subpixel classes are the same scatter rolled by {1, W, W+1}
    lanes (the wrapped lanes land on columns up0 leaves zero).  One MXU push
    instead of four matmuls + three adds against 4x the constants.
    """
    c = x.shape[0] // 4
    y = jnp.dot(x, up0, preferred_element_type=jnp.float32)         # (4C, P_hi)
    out = y[:c]
    for g, s in ((1, 1), (2, width_hi), (3, width_hi + 1)):
        out = out + _roll_lanes(y[g * c:(g + 1) * c], s, in_kernel)
    return out


def _forward_math(cfg, img, noise, snr, bundle, in_kernel):
    prm, cst = bundle['params'], bundle['consts']
    w_hi, w_lo = cfg['W'], cfg['W_lat']
    wff, wlat, wup = prm['wff'], prm['wlat'], prm['wup']
    cv, sq, upb = prm['cvecs'], prm['sq'], prm['up_bias']
    m_hi = cst['mask_hi'][...]
    m_lo = cst['mask_lo'][...]
    up0 = cst['up0'][...]
    avg_lo = cst['avg_lo'][...]
    img_m = cst['img_mask_lo'][...]
    tsnr = snr[0]                        # train SNR (AF context), scalar (SMEM)
    csnr = snr[1]                        # channel SNR, scalar (SMEM)

    conv = functools.partial(_conv3x3, in_kernel=in_kernel)

    # ---- encoder stand-in: conv / conv / stride-2 pick / AF(train_snr) / conv
    h = conv(img[...], wlat, WL8_E1, cv[CV_B_E1], m_hi, w_hi, act=True)
    h = conv(h, wff, WFF_E2, cv[CV_B_E2], m_hi, w_hi, act=True)
    # stride-2 downsample = pick the (even row, even col) lanes, expressed as a
    # transposed (NT) contraction against the shared scatter matrix up0.
    h = jax.lax.dot_general(h, up0, (((1,), (1,)), ((), ())),
                            preferred_element_type=jnp.float32)
    h = _af(sq[SQ_AFE_W1X], cv[CV_AFE_W1S], cv[CV_AFE_B1],
            sq[SQ_AFE_W2], cv[CV_AFE_B2], h, tsnr, avg_lo, img_m)
    z = conv(h, prm['we3'], 0, prm['be3'][...], m_lo, w_lo, act=False)

    # ---- AWGN channel: exactly JSCC.forward ----------------------------------
    zsq = z * z
    # z has exactly c_lat (unpadded) rows, so zsq.size counts real symbols only.
    es = 2.0 * jnp.sum(jnp.sum(zsq, axis=1, keepdims=True), axis=0,
                       keepdims=True) / zsq.size        # mean |complex symbol|^2
    atten = jnp.exp((jnp.zeros_like(es) + csnr) * (-_LN10_OVER_10))  # 10^(-snr/10)
    noise_pwr = jnp.sqrt(es * atten * 0.5)
    y = z + noise_pwr * noise[...]

    # ---- decoder stand-in: conv / resblock / AF / subpel-upsample / conv -----
    h = conv(y, wlat, WL8_D1, cv[CV_B_D1], m_lo, w_lo, act=True)
    t = conv(h, wff, WFF_RB1, cv[CV_B_RB1], m_lo, w_lo, act=True)
    t = conv(t, wff, WFF_RB2, cv[CV_B_RB2], m_lo, w_lo, act=True)
    h = h + t
    h = _af(sq[SQ_AFD_W1X], cv[CV_AFD_W1S], cv[CV_AFD_B1],
            sq[SQ_AFD_W2], cv[CV_AFD_B2], h, tsnr, avg_lo, img_m)

    up = _pixel_shuffle(
        conv(h, wup, WUP_SUBPEL, upb[UPB_SUBPEL], m_lo, w_lo, act=True),
        up0, w_hi, in_kernel)
    up = conv(up, wff, WFF_UPC, cv[CV_B_UPC], m_hi, w_hi, act=False)
    iden = _pixel_shuffle(
        conv(h, wup, WUP_SKIP, upb[UPB_SKIP], m_lo, w_lo, act=False),
        up0, w_hi, in_kernel)
    h = _igdn(up, sq[SQ_IGDN_GAMMA], cv[CV_IGDN_BETA]) + iden

    out = conv(h, prm['wout'], 0, prm['bout'][...], m_hi, w_hi, act=False)
    return jax.nn.sigmoid(out)                       # (c_out, B*H*W) lane-dense


# ----------------------------------------------------------------------------
# The single fused Pallas kernel + wrapper
# ----------------------------------------------------------------------------
def _jscc_kernel(cfg, bundle_def, img_ref, noise_ref, snr_ref, *rest):
    o_ref = rest[-1]
    bundle = jax.tree_util.tree_unflatten(bundle_def, list(rest[:-1]))
    o_ref[...] = _forward_math(cfg, img_ref, noise_ref, snr_ref, bundle,
                               in_kernel=True)


def _img_to_cp(cfg, img_nchw):
    b, c, h, w = img_nchw.shape
    x = jnp.transpose(img_nchw, (1, 0, 2, 3)).reshape(c, b * h * w)
    pad = cfg['c_img_pad'] - c
    if pad:                              # pad channels to a sublane multiple
        x = jnp.concatenate([x, jnp.zeros((pad, b * h * w), x.dtype)], axis=0)
    return x


def jscc_forward(cfg, bundle, img_nchw, snr, noise):
    """Full JSCC forward pass as one grid-less, VMEM-resident pallas_call."""
    b, _, h, w = img_nchw.shape
    img_cp = _img_to_cp(cfg, img_nchw)
    snr_vec = jnp.stack([jnp.asarray(cfg['train_snr'], jnp.float32),
                         jnp.asarray(snr, jnp.float32)])

    flat, bundle_def = jax.tree_util.tree_flatten(bundle)
    inputs = [img_cp, noise, snr_vec] + flat
    vmem = pl.BlockSpec(memory_space=pltpu.MemorySpace.VMEM)
    smem = pl.BlockSpec(memory_space=pltpu.MemorySpace.SMEM)
    out_cp = pl.pallas_call(
        functools.partial(_jscc_kernel, cfg, bundle_def),
        out_shape=jax.ShapeDtypeStruct((cfg['c_out'], b * h * w), jnp.float32),
        in_specs=[vmem, vmem, smem] + [vmem] * len(flat),
        out_specs=vmem,
    )(*inputs)
    # layout plumbing back to NCHW (tiny; kept outside the kernel so the
    # kernel's only HBM store is the lane-dense (c_out, B*H*W) slab).
    return jnp.transpose(out_cp.reshape(cfg['c_out'], b, h, w), (1, 0, 2, 3))


def jscc_reference(cfg, bundle, img_nchw, snr, noise):
    """Same math traced as plain XLA — validates the Pallas lowering."""
    b, _, h, w = img_nchw.shape
    snr_vec = jnp.stack([jnp.asarray(cfg['train_snr'], jnp.float32),
                         jnp.asarray(snr, jnp.float32)])
    out_cp = _forward_math(cfg, _img_to_cp(cfg, img_nchw), noise, snr_vec,
                           bundle, in_kernel=False)
    return jnp.transpose(out_cp.reshape(cfg['c_out'], b, h, w), (1, 0, 2, 3))


# ----------------------------------------------------------------------------
# Precomputed constants + deterministic packed parameter init
# ----------------------------------------------------------------------------
def _conv_masks(b, h, w):
    """(9, b*h*w) masks: mask[k, p] = 1 iff tap k's source pixel is inside the
    image for destination p — also zeroes every lane the circular roll wraps."""
    m = np.zeros((9, b * h * w), np.float32)
    k = 0
    for dh in (-1, 0, 1):
        for dw in (-1, 0, 1):
            for bb in range(b):
                for hh in range(h):
                    for ww in range(w):
                        if 0 <= hh + dh < h and 0 <= ww + dw < w:
                            m[k, (bb * h + hh) * w + ww] = 1.0
            k += 1
    return m


def _upsample0_mat(b, hl, wl, r=2):
    """(b*hl*wl, b*h*w) scatter of low-res pixel q to its (even row, even col)
    high-res lane.  Shared by the stride-2 downsample (NT contraction) and all
    four PixelShuffle subpixel classes (rolled by {0, 1, W, W+1} lanes)."""
    h, w = hl * r, wl * r
    m = np.zeros((b * hl * wl, b * h * w), np.float32)
    for bb in range(b):
        for hh in range(hl):
            for ww in range(wl):
                m[(bb * hl + hh) * wl + ww, (bb * h + r * hh) * w + r * ww] = 1.0
    return m


def _batch_mats(b, h, w):
    p = b * h * w
    avg = np.zeros((p, b), np.float32)
    img_mask = np.zeros((b, p), np.float32)
    for bb in range(b):
        avg[bb * h * w:(bb + 1) * h * w, bb] = 1.0 / (h * w)
        img_mask[bb, bb * h * w:(bb + 1) * h * w] = 1.0
    return avg, img_mask


def make_consts(cfg):
    b, h, w = cfg['B'], cfg['H'], cfg['W']
    hl, wl = cfg['H_lat'], cfg['W_lat']
    avg_lo, img_mask_lo = _batch_mats(b, hl, wl)
    # TODO(synk): up0 is O(P^2); replace with strided layout ops / a spatial
    #             grid before scaling past toy sizes (v7x has 64 MiB VMEM).
    return {
        'mask_hi': jnp.asarray(_conv_masks(b, h, w)),
        'mask_lo': jnp.asarray(_conv_masks(b, hl, wl)),
        'up0': jnp.asarray(_upsample0_mat(b, hl, wl, 2)),
        'avg_lo': jnp.asarray(avg_lo),
        'img_mask_lo': jnp.asarray(img_mask_lo),
    }


def init_params(key, cfg):
    # TODO(synk): enc/dec are externally injected nn.Modules in the PyTorch
    #             spec; these are representative stand-ins with deterministic
    #             random init, packed into a few stacked slabs (one DMA
    #             descriptor per stack instead of ~30 tiny padded operands).
    ci, cf, cl, co = cfg['c_img_pad'], cfg['c_feat'], cfg['c_lat'], cfg['c_out']
    assert ci == cl, "the (cf, 8) weight stack packs e1 and d1 together"
    keys = iter(jax.random.split(key, 16))

    def wmat(shape, scale=0.1):
        return scale * jax.random.normal(next(keys), shape, dtype=jnp.float32)

    return {
        # conv-weight stacks, (n*9, Cout, Cin); tap order k = (dh+1)*3 + (dw+1)
        'wff': wmat((4 * 9, cf, cf)),      # e2, rb.c1, rb.c2, up_conv
        'wlat': wmat((2 * 9, cf, ci)),     # e1, d1
        'wup': wmat((2 * 9, 4 * cf, cf)),  # subpel, up_skip
        'we3': wmat((9, cl, cf)),
        'wout': wmat((9, co, cf)),
        # column-vector stacks
        'cvecs': jnp.concatenate(          # conv biases, AF w1s/b1/b2, IGDN beta
            [wmat((12, cf, 1)), jnp.ones((1, cf, 1), jnp.float32)], axis=0),
        'up_bias': wmat((2, 4 * cf, 1)),   # subpel / up_skip biases
        'be3': wmat((cl, 1)),
        'bout': wmat((co, 1)),
        # (cf, cf) squares: AF w1x/w2 (x2) and IGDN gamma (positive init)
        'sq': jnp.concatenate(
            [wmat((4, cf, cf)), 0.1 * jnp.eye(cf, dtype=jnp.float32)[None]],
            axis=0),
    }


def _detect_roll_sign():
    """Verify pltpu.roll's direction against jnp.roll with a 1-op probe kernel
    so the conv-tap / subpixel shifts can never silently flip."""
    def k(x_ref, o_ref):
        o_ref[...] = pltpu.roll(x_ref[...], shift=1, axis=1)
    x = jnp.tile(jnp.arange(128, dtype=jnp.float32)[None, :], (8, 1))
    y = np.asarray(pl.pallas_call(
        k, out_shape=jax.ShapeDtypeStruct((8, 128), jnp.float32))(x))
    if np.array_equal(y, np.roll(np.asarray(x), 1, axis=1)):
        return 1
    assert np.array_equal(y, np.roll(np.asarray(x), -1, axis=1)), "unexpected roll"
    return -1


if __name__ == "__main__":
    _ROLL_SIGN = _detect_roll_sign()

    key = jax.random.PRNGKey(0)
    k_param, k_img, k_noise = jax.random.split(key, 3)

    B, H, W = 2, 16, 16
    cfg = dict(B=B, H=H, W=W, H_lat=H // 2, W_lat=W // 2,
               c_img=3, c_img_pad=8, c_feat=16, c_lat=8, c_out=3,
               train_snr=5.0)

    chan_snr = 10.0
    bundle = {'params': init_params(k_param, cfg), 'consts': make_consts(cfg)}

    img = jax.random.normal(k_img, (B, cfg['c_img'], H, W), dtype=jnp.float32)
    # torch.randn_like on the latent, drawn host-side and fed once to the kernel.
    # TODO(synk): generate in-kernel via pltpu.prng_seed / pltpu.stateful_normal
    #             (kept as an input so the XLA reference sees identical noise).
    noise = jax.random.normal(
        k_noise, (cfg['c_lat'], B * cfg['H_lat'] * cfg['W_lat']),
        dtype=jnp.float32)

    fwd = jax.jit(functools.partial(jscc_forward, cfg))
    out = jax.block_until_ready(fwd(bundle, img, chan_snr, noise))
    assert out.shape == (B, cfg['c_out'], H, W), out.shape

    # Validate the Pallas lowering against the identical math in plain XLA.
    with jax.default_matmul_precision("highest"):
        ref = jax.block_until_ready(
            jscc_reference(cfg, bundle, img, chan_snr, noise))
    np.testing.assert_allclose(np.asarray(out), np.asarray(ref),
                               rtol=5e-3, atol=5e-3)

    print("KERNEL_OK")
</pallas_src>

<mosaic_0001>
module attributes {stable_mosaic.version = 11 : i64} {
  func.func @k(%arg0: memref<8x128xf32, #tpu.memory_space<vmem>>, %arg1: memref<8x128xf32, #tpu.memory_space<vmem>>) attributes {dimension_semantics = [], scalar_prefetch = 0 : i64, scratch_operands = 0 : i64, tpu.core_type = #tpu.core_type<tc>} {
    %c0 = arith.constant 0 : index
    %c0_0 = arith.constant 0 : index
    %0 = vector.load %arg0[%c0, %c0_0] : memref<8x128xf32, #tpu.memory_space<vmem>>, vector<8x128xf32>
    %c1_i32 = arith.constant 1 : i32
    %1 = tpu.dynamic_rotate %0 by %c1_i32 dim 1 : vector<8x128xf32>, i32 -> vector<8x128xf32>
    %c0_1 = arith.constant 0 : index
    %c0_2 = arith.constant 0 : index
    %2 = vector.load %arg1[%c0_1, %c0_2] : memref<8x128xf32, #tpu.memory_space<vmem>>, vector<8x128xf32>
    tpu.vector_store %arg1[%c0_1, %c0_2], %1 {strides = array<i32>} : memref<8x128xf32, #tpu.memory_space<vmem>>, vector<8x128xf32>,
    return
  }
}

</mosaic_0001>

<llo_original>
// kernel: tpu_custom_call.1
$region0: #{tpu_custom_call.1}
  #allocation0 [shape = 'u32[]', space=smem, size = 0x4, offset = 0x4, fixed_abs, tag = 'smem constant byte address 0x4 - core index']
  #allocation1 [shape = 'u32[72,128]{1,0:T(1,128)}', space=vmem, size = 0x9000, scoped, tag = 'internal scratch']
  %s0 = inlined_call_operand.hbm [shape: f32[8,128], index: 0, kind: input, shape index: {}]
  %s1 = inlined_call_operand.hbm [shape: f32[8,128], index: 1, kind: output, shape index: {}]
  %s2 = sld [smem:[#allocation0]]
  $region18: #{tpu_custom_call.1} parent=0
    _
  %s4 = ssub.s32 1, %s2
  %s5 = scalar_select 0, %s4, %s2
  $region1: #{tpu_custom_call.1} parent=0
    #allocation2 [shape = 'u8[4096]{0}', space=vmem, size = 0x1000, scoped, tag = 'input window, operand 0, single buffered']
    #allocation3 [shape = 's32[1]{0}', space=sflag, size = 0x4, scoped, tag = 'scoped memory for tpu_custom_call.1']
    #allocation4 [shape = 's32[1]{0}', space=sflag, size = 0x4, scoped, tag = 'scoped memory for tpu_custom_call.1']
    #allocation5 [shape = 'u8[4096]{0}', space=vmem, size = 0x1000, scoped, tag = 'output window, operand 0, single buffered']
    %6 = vsyncpa [#allocation3], 0
    %7 = vsyncpa [#allocation4], 0
    // Predicated region
    $region2: #{tpu_custom_call.1} parent=1 // pred_check
      _
    $region3: #{tpu_custom_call.1} parent=1 // pred_check_branch
      %9 = sbr.rel (0) target = $region5
    $region4: #{tpu_custom_call.1} parent=1 // pred_region
      %11 = vsyncadd [#allocation3], 0
      %s13 = sshll.u32 %s0, 4
      %s14 = int_to_ptr.hbm [resolvable:$true] %s13
      %s15 = sshll.u32 [#allocation2], 4
      %s16 = int_to_ptr.vmem [resolvable:$true] %s15
      %18 = dma.hbm_to_vmem [thread:$0]  %s14, 128, %s16, [#allocation3]
    $region5: #{tpu_custom_call.1} parent=1 // pred_fallthru
      _
    // Predicated region
    $region6: #{tpu_custom_call.1} parent=1 // pred_check
      _
    $region7: #{tpu_custom_call.1} parent=1 // pred_check_branch
      %20 = sbr.rel (0) target = $region9
    $region8: #{tpu_custom_call.1} parent=1 // pred_region
      %22 = dma.done [#allocation3], 128
    $region9: #{tpu_custom_call.1} parent=1 // pred_fallthru
      _
    %v23 = vld [vmem:[#allocation2] sm:$0xff]
    %24 = vrot.lane.b32.xlu0 %v23, 1
    %v25 = vpop.permute.xlu0 %24
    %26 = vst [vmem:[#allocation5] sm:$0xff] %v25
    // Predicated region
    $region10: #{tpu_custom_call.1} parent=1 // pred_check
      _
    $region11: #{tpu_custom_call.1} parent=1 // pred_check_branch
      %28 = sbr.rel (0) target = $region13
    $region12: #{tpu_custom_call.1} parent=1 // pred_region
      %30 = vsyncadd [#allocation4], 0
      %s32 = sshll.u32 [#allocation5], 4
      %s33 = int_to_ptr.vmem [resolvable:$true] %s32
      %s34 = sshll.u32 %s1, 4
      %s35 = int_to_ptr.hbm [resolvable:$true] %s34
      %37 = dma.vmem_to_hbm [thread:$0]  %s33, 128, %s35, [#allocation4]
    $region13: #{tpu_custom_call.1} parent=1 // pred_fallthru
      _
    // Predicated region
    $region14: #{tpu_custom_call.1} parent=1 // pred_check
      _
    $region15: #{tpu_custom_call.1} parent=1 // pred_check_branch
      %39 = sbr.rel (0) target = $region17
    $region16: #{tpu_custom_call.1} parent=1 // pred_region
      %41 = dma.done [#allocation4], 128
    $region17: #{tpu_custom_call.1} parent=1 // pred_fallthru
      _
    %42 = vsyncpa [#allocation3], 1
    %43 = vsyncpa [#allocation4], 1

</llo_original>
